<compile_context>
chip_gen: v7x
topology: tpu7x:2x2x1
jax: 0.10.0
libtpu: 0.0.40
codegen_flags: <defaults>
</compile_context>

<pallas_src>
import functools

import jax
import jax.numpy as jnp
from jax.experimental import pallas as pl
from jax.experimental.pallas import tpu as pltpu


def _round_up(x, m):
    return ((x + m - 1) // m) * m


# ---------------------------------------------------------------------------
# Mask construction: pad_mask & subsequent_mask & logical_and.
# Trivial glue that only feeds the injected transformer layer -> plain JAX.
# ---------------------------------------------------------------------------
def make_caption_mask(captions, pad_token):
    b, s = captions.shape
    not_pad = (captions != pad_token)[:, None, :]              # keys != pad
    not_pad = jnp.broadcast_to(not_pad, (b, s, s))
    causal = jnp.tril(jnp.ones((s, s), dtype=jnp.bool_))       # j <= i
    return jnp.logical_and(not_pad, causal[None, :, :])


# ---------------------------------------------------------------------------
# Fused transformer-encoder kernel:
#     for l in range(N): h = h + (h @ W[l] + b[l])
#     out = ln_a * (h - mean) / (unbiased_std + eps) + ln_b
# One grid step = one row tile; weights stay resident in VMEM.
# ---------------------------------------------------------------------------
def _fused_encoder_kernel(x_ref, w_ref, b_ref, g_ref, beta_ref, o_ref, h_ref,
                          *, n_layers, d_valid, eps):
    # Activation tile resident in VMEM scratch for the whole layer stack.
    h_ref[...] = x_ref[...].astype(jnp.float32)
    needs_cast = w_ref.dtype != jnp.float32

    def layer_body(l, carry):
        h = h_ref[...]
        lhs = h.astype(w_ref.dtype) if needs_cast else h
        y = jnp.dot(lhs, w_ref[l], preferred_element_type=jnp.float32)
        h_ref[...] = h + y + b_ref[l]
        return carry

    jax.lax.fori_loop(0, n_layers, layer_body, 0, unroll=True)

    # Final LayerNorm (PyTorch: unbiased std, eps added to std), masked to the
    # valid feature columns when D was padded up to a lane multiple.
    h = h_ref[...]
    d_pad = h.shape[-1]
    if d_pad == d_valid:
        mean = jnp.mean(h, axis=-1, keepdims=True)
        diff = h - mean
    else:
        col = jax.lax.broadcasted_iota(jnp.int32, h.shape, 1)
        valid = (col < d_valid).astype(jnp.float32)
        mean = jnp.sum(h * valid, axis=-1, keepdims=True) * (1.0 / d_valid)
        diff = (h - mean) * valid
    var = jnp.sum(diff * diff, axis=-1, keepdims=True) * (1.0 / (d_valid - 1))
    std = jnp.sqrt(var)
    inv = pl.reciprocal(std + eps, approx=True)     # EUP, frees the VALU
    o_ref[...] = (g_ref[...] * (diff * inv) + beta_ref[...]).astype(o_ref.dtype)


def transformer_encoder_pallas(x, cap_mask, w_stack, b_stack, ln_a, ln_b,
                               *, eps=1e-6, max_row_tile=256,
                               weight_dtype=jnp.float32):
    """x: (B, S, D).  cap_mask accepted for API parity (unused by the
    representative residual-linear layers)."""
    del cap_mask
    bsz, seq, d = x.shape
    n_layers = w_stack.shape[0]
    d_pad = _round_up(d, 128)
    rows = bsz * seq
    # Adaptive row tile: big tiles for big problems, no padded-garbage compute
    # for tiny ones.  Always a multiple of 8 (sublane requirement).
    row_tile = min(max_row_tile, _round_up(rows, 8))
    rows_pad = _round_up(rows, row_tile)

    h = x.reshape(rows, d).astype(jnp.float32)
    h = jnp.pad(h, ((0, rows_pad - rows), (0, d_pad - d)))
    w_p = jnp.pad(w_stack, ((0, 0), (0, d_pad - d), (0, d_pad - d)))
    w_p = w_p.astype(weight_dtype)                       # bf16 option for v7x
    b_p = jnp.pad(b_stack, ((0, 0), (0, d_pad - d)))
    b_p = b_p.reshape(n_layers, 1, d_pad).astype(jnp.float32)
    g_p = jnp.pad(ln_a, (0, d_pad - d)).reshape(1, d_pad).astype(jnp.float32)
    beta_p = jnp.pad(ln_b, (0, d_pad - d)).reshape(1, d_pad).astype(jnp.float32)

    # Explicit VMEM budget: double-buffered row tiles (in/out), resident
    # weight stack, activation scratch, biases + LN params.
    w_bytes = n_layers * d_pad * d_pad * jnp.dtype(weight_dtype).itemsize
    est = (4 * row_tile * d_pad * 4        # x + out row tiles, double buffered
           + 2 * w_bytes                   # resident weight stack
           + row_tile * d_pad * 4          # activation scratch
           + 16 * n_layers * d_pad * 4)    # biases + LN params
    vmem_limit = int(min(max(2 * est, 8 << 20), 64 << 20))

    kern = functools.partial(_fused_encoder_kernel,
                             n_layers=n_layers, d_valid=d, eps=eps)
    out = pl.pallas_call(
        kern,
        out_shape=jax.ShapeDtypeStruct((rows_pad, d_pad), jnp.float32),
        grid_spec=pltpu.PrefetchScalarGridSpec(
            num_scalar_prefetch=0,
            grid=(rows_pad // row_tile,),
            in_specs=[
                pl.BlockSpec((row_tile, d_pad), lambda i: (i, 0)),       # rows
                pl.BlockSpec((n_layers, d_pad, d_pad),
                             lambda i: (0, 0, 0)),                       # W resident
                pl.BlockSpec((n_layers, 1, d_pad), lambda i: (0, 0, 0)), # b resident
                pl.BlockSpec((1, d_pad), lambda i: (0, 0)),              # ln gamma
                pl.BlockSpec((1, d_pad), lambda i: (0, 0)),              # ln beta
            ],
            out_specs=pl.BlockSpec((row_tile, d_pad), lambda i: (i, 0)),
            scratch_shapes=[pltpu.VMEM((row_tile, d_pad), jnp.float32)],
        ),
        compiler_params=pltpu.CompilerParams(
            dimension_semantics=("parallel",),
            vmem_limit_bytes=vmem_limit,
        ),
        input_output_aliases={0: 0},      # reuse the activation buffer in place
    )(h, w_p, b_p, g_p, beta_p)

    return out[:rows, :d].reshape(bsz, seq, d)


# ---------------------------------------------------------------------------
# eos_proj: Linear(d_model, d_model, bias=False) on the last token.
# Weight is stored in math convention: eos_out = x @ w_eos.
# ---------------------------------------------------------------------------
def _eos_proj_kernel(x_ref, w_ref, o_ref):
    o_ref[...] = jnp.dot(x_ref[...], w_ref[...],
                         preferred_element_type=jnp.float32).astype(o_ref.dtype)


def eos_proj_pallas(x, w):
    bsz, d = x.shape
    d_pad = _round_up(d, 128)
    b_pad = _round_up(bsz, 8)
    xp = jnp.pad(x.astype(jnp.float32), ((0, b_pad - bsz), (0, d_pad - d)))
    wp = jnp.pad(w.astype(jnp.float32), ((0, d_pad - d), (0, d_pad - d)))
    out = pl.pallas_call(
        _eos_proj_kernel,
        out_shape=jax.ShapeDtypeStruct((b_pad, d_pad), jnp.float32),
    )(xp, wp)
    return out[:bsz, :d]


# ---------------------------------------------------------------------------
# Text_Encoder.forward
# ---------------------------------------------------------------------------
def text_encoder_forward(captions, pad_token, embed_table,
                         w_stack, b_stack, ln_a, ln_b, w_eos):
    cap_mask = make_caption_mask(captions, pad_token)
    cap_embs = jnp.take(embed_table, captions, axis=0)            # (B, S, D)
    enc_out = transformer_encoder_pallas(cap_embs, cap_mask,
                                         w_stack, b_stack, ln_a, ln_b)
    eos_out = eos_proj_pallas(enc_out[:, -1, :], w_eos)
    return enc_out, eos_out


# ---------------------------------------------------------------------------
# Pure-JAX reference for the self-check
# ---------------------------------------------------------------------------
def text_encoder_reference(captions, pad_token, embed_table,
                           w_stack, b_stack, ln_a, ln_b, w_eos, eps=1e-6):
    h = jnp.take(embed_table, captions, axis=0)
    for l in range(w_stack.shape[0]):
        h = h + (h @ w_stack[l] + b_stack[l])
    mean = jnp.mean(h, axis=-1, keepdims=True)
    var = jnp.sum((h - mean) ** 2, axis=-1, keepdims=True) / (h.shape[-1] - 1)
    std = jnp.sqrt(var)
    enc = ln_a * ((h - mean) / (std + eps)) + ln_b
    eos = enc[:, -1, :] @ w_eos
    return enc, eos


if __name__ == "__main__":
    B, S, D, N_LAYERS, VOCAB, PAD = 2, 8, 32, 3, 40, 0

    key = jax.random.PRNGKey(0)
    kc, ke, kw, kb, kp = jax.random.split(key, 5)

    captions = jax.random.randint(kc, (B, S), minval=1, maxval=VOCAB,
                                  dtype=jnp.int32)
    captions = captions.at[1, -2:].set(PAD)           # a few pad tokens

    embed_table = jax.random.normal(ke, (VOCAB, D), dtype=jnp.float32) * 0.5

    # clones(layer, N) == N deepcopies -> identical initial parameters
    w0 = jax.random.normal(kw, (D, D), dtype=jnp.float32) * 0.05
    b0 = jax.random.normal(kb, (D,), dtype=jnp.float32) * 0.05
    w_stack = jnp.stack([w0] * N_LAYERS)              # (N, D, D)
    b_stack = jnp.stack([b0] * N_LAYERS)              # (N, D)

    ln_a = jnp.ones((D,), dtype=jnp.float32)          # LayerNorm a_2
    ln_b = jnp.zeros((D,), dtype=jnp.float32)         # LayerNorm b_2

    w_eos = jax.random.normal(kp, (D, D), dtype=jnp.float32) * 0.1

    fwd = jax.jit(text_encoder_forward)
    enc_out, eos_out = fwd(captions, PAD, embed_table,
                           w_stack, b_stack, ln_a, ln_b, w_eos)
    enc_out = jax.block_until_ready(enc_out)
    eos_out = jax.block_until_ready(eos_out)

    enc_ref, eos_ref = text_encoder_reference(captions, PAD, embed_table,
                                              w_stack, b_stack, ln_a, ln_b,
                                              w_eos)
    assert enc_out.shape == (B, S, D) and eos_out.shape == (B, D)
    # Loose-ish tolerance: LayerNorm uses the approximate EUP reciprocal.
    assert jnp.allclose(enc_out, enc_ref, atol=1e-2, rtol=1e-2), "enc mismatch"
    assert jnp.allclose(eos_out, eos_ref, atol=1e-2, rtol=1e-2), "eos mismatch"

    print("KERNEL_OK")
</pallas_src>

<mosaic_0001>
module attributes {stable_mosaic.version = 11 : i64} {
  func.func @_fused_encoder_kernel(%arg0: i32, %arg1: memref<16x128xf32, #tpu.memory_space<vmem>>, %arg2: memref<3x128x128xf32, #tpu.memory_space<vmem>>, %arg3: memref<3x1x128xf32, #tpu.memory_space<vmem>>, %arg4: memref<1x128xf32, #tpu.memory_space<vmem>>, %arg5: memref<1x128xf32, #tpu.memory_space<vmem>>, %arg6: memref<16x128xf32, #tpu.memory_space<vmem>>, %arg7: memref<16x128xf32, #tpu.memory_space<vmem>>) attributes {dimension_semantics = [#tpu.dimension_semantics<parallel>], iteration_bounds = array<i64: 1>, scalar_prefetch = 0 : i64, scratch_operands = 1 : i64, tpu.core_type = #tpu.core_type<tc>, window_params = [{transform_indices = @transform_0, window_bounds = array<i64: 16, 128>}, {pipeline_mode = #tpu.pipeline_mode<synchronous>, transform_indices = @transform_1, window_bounds = array<i64: 3, 128, 128>}, {pipeline_mode = #tpu.pipeline_mode<synchronous>, transform_indices = @transform_2, window_bounds = array<i64: 3, 1, 128>}, {pipeline_mode = #tpu.pipeline_mode<synchronous>, transform_indices = @transform_3, window_bounds = array<i64: 1, 128>}, {pipeline_mode = #tpu.pipeline_mode<synchronous>, transform_indices = @transform_4, window_bounds = array<i64: 1, 128>}, {transform_indices = @transform_5, window_bounds = array<i64: 16, 128>}]} {
    %c0 = arith.constant 0 : index
    %c0_0 = arith.constant 0 : index
    %0 = vector.load %arg1[%c0, %c0_0] : memref<16x128xf32, #tpu.memory_space<vmem>>, vector<16x128xf32>
    %c0_1 = arith.constant 0 : index
    %c0_2 = arith.constant 0 : index
    %1 = vector.load %arg7[%c0_1, %c0_2] : memref<16x128xf32, #tpu.memory_space<vmem>>, vector<16x128xf32>
    tpu.vector_store %arg7[%c0_1, %c0_2], %0 {strides = array<i32>} : memref<16x128xf32, #tpu.memory_space<vmem>>, vector<16x128xf32>,
    %c0_i32 = arith.constant 0 : i32
    %c0_3 = arith.constant 0 : index
    %c0_4 = arith.constant 0 : index
    %2 = vector.load %arg7[%c0_3, %c0_4] : memref<16x128xf32, #tpu.memory_space<vmem>>, vector<16x128xf32>
    %3 = arith.index_cast %c0_i32 : i32 to index
    %c0_5 = arith.constant 0 : index
    %c0_6 = arith.constant 0 : index
    %4 = vector.load %arg2[%3, %c0_5, %c0_6] : memref<3x128x128xf32, #tpu.memory_space<vmem>>, vector<1x128x128xf32>
    %5 = vector.shape_cast %4 : vector<1x128x128xf32> to vector<128x128xf32>
    %cst = arith.constant dense<0.000000e+00> : vector<16x128xf32>
    %6 = tpu.matmul %2, %5, %cst {dimension_numbers = #tpu.dot_dimension_numbers<[1], [0], [0], [1], [0, 0, 1, 1], [], []>} : vector<16x128xf32>, vector<128x128xf32>, vector<16x128xf32> -> vector<16x128xf32>
    %7 = arith.addf %2, %6 : vector<16x128xf32>
    %8 = arith.index_cast %c0_i32 : i32 to index
    %c0_7 = arith.constant 0 : index
    %c0_8 = arith.constant 0 : index
    %9 = vector.load %arg3[%8, %c0_7, %c0_8] : memref<3x1x128xf32, #tpu.memory_space<vmem>>, vector<1x1x128xf32>
    %10 = vector.shape_cast %9 : vector<1x1x128xf32> to vector<1x128xf32>
    %11 = vector.broadcast %10 : vector<1x128xf32> to vector<16x128xf32>
    %12 = arith.addf %7, %11 : vector<16x128xf32>
    %c0_9 = arith.constant 0 : index
    %c0_10 = arith.constant 0 : index
    %13 = vector.load %arg7[%c0_9, %c0_10] : memref<16x128xf32, #tpu.memory_space<vmem>>, vector<16x128xf32>
    tpu.vector_store %arg7[%c0_9, %c0_10], %12 {strides = array<i32>} : memref<16x128xf32, #tpu.memory_space<vmem>>, vector<16x128xf32>,
    %c1_i32 = arith.constant 1 : i32
    %c0_11 = arith.constant 0 : index
    %c0_12 = arith.constant 0 : index
    %14 = vector.load %arg7[%c0_11, %c0_12] : memref<16x128xf32, #tpu.memory_space<vmem>>, vector<16x128xf32>
    %15 = arith.index_cast %c1_i32 : i32 to index
    %c0_13 = arith.constant 0 : index
    %c0_14 = arith.constant 0 : index
    %16 = vector.load %arg2[%15, %c0_13, %c0_14] : memref<3x128x128xf32, #tpu.memory_space<vmem>>, vector<1x128x128xf32>
    %17 = vector.shape_cast %16 : vector<1x128x128xf32> to vector<128x128xf32>
    %cst_15 = arith.constant dense<0.000000e+00> : vector<16x128xf32>
    %18 = tpu.matmul %14, %17, %cst_15 {dimension_numbers = #tpu.dot_dimension_numbers<[1], [0], [0], [1], [0, 0, 1, 1], [], []>} : vector<16x128xf32>, vector<128x128xf32>, vector<16x128xf32> -> vector<16x128xf32>
    %19 = arith.addf %14, %18 : vector<16x128xf32>
    %20 = arith.index_cast %c1_i32 : i32 to index
    %c0_16 = arith.constant 0 : index
    %c0_17 = arith.constant 0 : index
    %21 = vector.load %arg3[%20, %c0_16, %c0_17] : memref<3x1x128xf32, #tpu.memory_space<vmem>>, vector<1x1x128xf32>
    %22 = vector.shape_cast %21 : vector<1x1x128xf32> to vector<1x128xf32>
    %23 = vector.broadcast %22 : vector<1x128xf32> to vector<16x128xf32>
    %24 = arith.addf %19, %23 : vector<16x128xf32>
    %c0_18 = arith.constant 0 : index
    %c0_19 = arith.constant 0 : index
    %25 = vector.load %arg7[%c0_18, %c0_19] : memref<16x128xf32, #tpu.memory_space<vmem>>, vector<16x128xf32>
    tpu.vector_store %arg7[%c0_18, %c0_19], %24 {strides = array<i32>} : memref<16x128xf32, #tpu.memory_space<vmem>>, vector<16x128xf32>,
    %c2_i32 = arith.constant 2 : i32
    %c0_20 = arith.constant 0 : index
    %c0_21 = arith.constant 0 : index
    %26 = vector.load %arg7[%c0_20, %c0_21] : memref<16x128xf32, #tpu.memory_space<vmem>>, vector<16x128xf32>
    %27 = arith.index_cast %c2_i32 : i32 to index
    %c0_22 = arith.constant 0 : index
    %c0_23 = arith.constant 0 : index
    %28 = vector.load %arg2[%27, %c0_22, %c0_23] : memref<3x128x128xf32, #tpu.memory_space<vmem>>, vector<1x128x128xf32>
    %29 = vector.shape_cast %28 : vector<1x128x128xf32> to vector<128x128xf32>
    %cst_24 = arith.constant dense<0.000000e+00> : vector<16x128xf32>
    %30 = tpu.matmul %26, %29, %cst_24 {dimension_numbers = #tpu.dot_dimension_numbers<[1], [0], [0], [1], [0, 0, 1, 1], [], []>} : vector<16x128xf32>, vector<128x128xf32>, vector<16x128xf32> -> vector<16x128xf32>
    %31 = arith.addf %26, %30 : vector<16x128xf32>
    %32 = arith.index_cast %c2_i32 : i32 to index
    %c0_25 = arith.constant 0 : index
    %c0_26 = arith.constant 0 : index
    %33 = vector.load %arg3[%32, %c0_25, %c0_26] : memref<3x1x128xf32, #tpu.memory_space<vmem>>, vector<1x1x128xf32>
    %34 = vector.shape_cast %33 : vector<1x1x128xf32> to vector<1x128xf32>
    %35 = vector.broadcast %34 : vector<1x128xf32> to vector<16x128xf32>
    %36 = arith.addf %31, %35 : vector<16x128xf32>
    %c0_27 = arith.constant 0 : index
    %c0_28 = arith.constant 0 : index
    %37 = vector.load %arg7[%c0_27, %c0_28] : memref<16x128xf32, #tpu.memory_space<vmem>>, vector<16x128xf32>
    tpu.vector_store %arg7[%c0_27, %c0_28], %36 {strides = array<i32>} : memref<16x128xf32, #tpu.memory_space<vmem>>, vector<16x128xf32>,
    %c3_i32 = arith.constant 3 : i32
    %c0_29 = arith.constant 0 : index
    %c0_30 = arith.constant 0 : index
    %38 = vector.load %arg7[%c0_29, %c0_30] : memref<16x128xf32, #tpu.memory_space<vmem>>, vector<16x128xf32>
    %39 = tpu.iota {dimensions = array<i32: 1>} : vector<16x128xi32>
    %c32_i32 = arith.constant 32 : i32
    %40 = vector.broadcast %c32_i32 : i32 to vector<16x128xi32>
    %41 = arith.cmpi slt, %39, %40 : vector<16x128xi32>
    %42 = arith.extui %41 : vector<16x128xi1> to vector<16x128xi32>
    %43 = arith.sitofp %42 : vector<16x128xi32> to vector<16x128xf32>
    %44 = arith.mulf %38, %43 : vector<16x128xf32>
    %cst_31 = arith.constant dense<0.000000e+00> : vector<16xf32>
    %45 = vector.multi_reduction <add>, %44, %cst_31 [1] : vector<16x128xf32> to vector<16xf32>
    %46 = vector.shape_cast %45 : vector<16xf32> to vector<16x1xf32>
    %cst_32 = arith.constant 3.125000e-02 : f32
    %47 = vector.broadcast %cst_32 : f32 to vector<16x1xf32>
    %48 = arith.mulf %46, %47 : vector<16x1xf32>
    %49 = vector.broadcast %48 : vector<16x1xf32> to vector<16x128xf32>
    %50 = arith.subf %38, %49 : vector<16x128xf32>
    %51 = arith.mulf %50, %43 : vector<16x128xf32>
    %52 = arith.mulf %51, %51 : vector<16x128xf32>
    %cst_33 = arith.constant dense<0.000000e+00> : vector<16xf32>
    %53 = vector.multi_reduction <add>, %52, %cst_33 [1] : vector<16x128xf32> to vector<16xf32>
    %54 = vector.shape_cast %53 : vector<16xf32> to vector<16x1xf32>
    %cst_34 = arith.constant 0.0322580636 : f32
    %55 = vector.broadcast %cst_34 : f32 to vector<16x1xf32>
    %56 = arith.mulf %54, %55 : vector<16x1xf32>
    %57 = math.sqrt %56 : vector<16x1xf32>
    %cst_35 = arith.constant 9.99999997E-7 : f32
    %58 = vector.broadcast %cst_35 : f32 to vector<16x1xf32>
    %59 = arith.addf %57, %58 : vector<16x1xf32>
    %60 = tpu.reciprocal %59 {approx = true} : vector<16x1xf32> -> vector<16x1xf32>
    %c0_36 = arith.constant 0 : index
    %c0_37 = arith.constant 0 : index
    %61 = vector.load %arg4[%c0_36, %c0_37] : memref<1x128xf32, #tpu.memory_space<vmem>>, vector<1x128xf32>
    %62 = vector.broadcast %60 : vector<16x1xf32> to vector<16x128xf32>
    %63 = arith.mulf %51, %62 : vector<16x128xf32>
    %64 = vector.broadcast %61 : vector<1x128xf32> to vector<16x128xf32>
    %65 = arith.mulf %64, %63 : vector<16x128xf32>
    %c0_38 = arith.constant 0 : index
    %c0_39 = arith.constant 0 : index
    %66 = vector.load %arg5[%c0_38, %c0_39] : memref<1x128xf32, #tpu.memory_space<vmem>>, vector<1x128xf32>
    %67 = vector.broadcast %66 : vector<1x128xf32> to vector<16x128xf32>
    %68 = arith.addf %65, %67 : vector<16x128xf32>
    %c0_40 = arith.constant 0 : index
    %c0_41 = arith.constant 0 : index
    %69 = vector.load %arg6[%c0_40, %c0_41] : memref<16x128xf32, #tpu.memory_space<vmem>>, vector<16x128xf32>
    tpu.vector_store %arg6[%c0_40, %c0_41], %68 {strides = array<i32>} : memref<16x128xf32, #tpu.memory_space<vmem>>, vector<16x128xf32>,
    return
  }
  func.func @transform_0(%arg0: i32) -> (i32, i32) {
    %c0_i32 = arith.constant 0 : i32
    %c0_i32_0 = arith.constant 0 : i32
    return %arg0, %c0_i32 : i32, i32
  }
  func.func @transform_1(%arg0: i32) -> (i32, i32, i32) {
    %c0_i32 = arith.constant 0 : i32
    %c0_i32_0 = arith.constant 0 : i32
    %c0_i32_1 = arith.constant 0 : i32
    %c0_i32_2 = arith.constant 0 : i32
    return %c0_i32, %c0_i32_0, %c0_i32_1 : i32, i32, i32
  }
  func.func @transform_2(%arg0: i32) -> (i32, i32, i32) {
    %c0_i32 = arith.constant 0 : i32
    %c0_i32_0 = arith.constant 0 : i32
    %c0_i32_1 = arith.constant 0 : i32
    %c0_i32_2 = arith.constant 0 : i32
    return %c0_i32, %c0_i32_0, %c0_i32_1 : i32, i32, i32
  }
  func.func @transform_3(%arg0: i32) -> (i32, i32) {
    %c0_i32 = arith.constant 0 : i32
    %c0_i32_0 = arith.constant 0 : i32
    %c0_i32_1 = arith.constant 0 : i32
    return %c0_i32, %c0_i32_0 : i32, i32
  }
  func.func @transform_4(%arg0: i32) -> (i32, i32) {
    %c0_i32 = arith.constant 0 : i32
    %c0_i32_0 = arith.constant 0 : i32
    %c0_i32_1 = arith.constant 0 : i32
    return %c0_i32, %c0_i32_0 : i32, i32
  }
  func.func @transform_5(%arg0: i32) -> (i32, i32) {
    %c0_i32 = arith.constant 0 : i32
    %c0_i32_0 = arith.constant 0 : i32
    return %arg0, %c0_i32 : i32, i32
  }
}

module attributes {stable_mosaic.version = 11 : i64} {
  func.func @_eos_proj_kernel(%arg0: memref<8x128xf32, #tpu.memory_space<vmem>>, %arg1: memref<128x128xf32, #tpu.memory_space<vmem>>, %arg2: memref<8x128xf32, #tpu.memory_space<vmem>>) attributes {dimension_semantics = [], scalar_prefetch = 0 : i64, scratch_operands = 0 : i64, tpu.core_type = #tpu.core_type<tc>} {
    %c0 = arith.constant 0 : index
    %c0_0 = arith.constant 0 : index
    %0 = vector.load %arg0[%c0, %c0_0] : memref<8x128xf32, #tpu.memory_space<vmem>>, vector<8x128xf32>
    %c0_1 = arith.constant 0 : index
    %c0_2 = arith.constant 0 : index
    %1 = vector.load %arg1[%c0_1, %c0_2] : memref<128x128xf32, #tpu.memory_space<vmem>>, vector<128x128xf32>
    %cst = arith.constant dense<0.000000e+00> : vector<8x128xf32>
    %2 = tpu.matmul %0, %1, %cst {dimension_numbers = #tpu.dot_dimension_numbers<[1], [0], [0], [1], [0, 0, 1, 1], [], []>} : vector<8x128xf32>, vector<128x128xf32>, vector<8x128xf32> -> vector<8x128xf32>
    %c0_3 = arith.constant 0 : index
    %c0_4 = arith.constant 0 : index
    %3 = vector.load %arg2[%c0_3, %c0_4] : memref<8x128xf32, #tpu.memory_space<vmem>>, vector<8x128xf32>
    tpu.vector_store %arg2[%c0_3, %c0_4], %2 {strides = array<i32>} : memref<8x128xf32, #tpu.memory_space<vmem>>, vector<8x128xf32>,
    return
  }
}

</mosaic_0001>

<llo_original>
// kernel: text_encoder_forward.3
$region0: #{text_encoder_forward.3}
  #allocation0 [shape = 'u32[]', space=smem, size = 0x4, offset = 0x4, fixed_abs, tag = 'smem constant byte address 0x4 - core index']
  #allocation1 [shape = 'u32[144,128]{1,0:T(1,128)}', space=vmem, size = 0x12000, scoped, tag = 'internal scratch']
  %s0 = inlined_call_operand.vmem [shape: f32[8,128], index: 0, kind: input, shape index: {}]
  %s1 = inlined_call_operand.vmem [shape: f32[128,128], index: 1, kind: input, shape index: {}]
  %s2 = inlined_call_operand.vmem [shape: f32[8,128], index: 2, kind: output, shape index: {}]
  %s3 = sld [smem:[#allocation0]]
  $region18: #{text_encoder_forward.3} parent=0
    _
  %s5 = ssub.s32 1, %s3
  %s6 = scalar_select 0, %s5, %s3
  // Predicated region
  $region2: #{text_encoder_forward.3} parent=0 // pred_check
    _
  $region3: #{text_encoder_forward.3} parent=0 // pred_check_branch
    %8 = sbr.rel (0) target = $region5
  $region4: #{text_encoder_forward.3} parent=0 // pred_region
    _
  $region5: #{text_encoder_forward.3} parent=0 // pred_fallthru
    _
  // Predicated region
  $region6: #{text_encoder_forward.3} parent=0 // pred_check
    _
  $region7: #{text_encoder_forward.3} parent=0 // pred_check_branch
    %10 = sbr.rel (0) target = $region9
  $region8: #{text_encoder_forward.3} parent=0 // pred_region
    _
  $region9: #{text_encoder_forward.3} parent=0 // pred_fallthru
    _
  %v11 = vld [vmem:[%s0] sm:$0xff]
  %v12 = vld [vmem:[%s1] sm:$0xff]
  %v13 = vld [vmem:[%s1 + $0x8] sm:$0xff]
  %v14 = vld [vmem:[%s1 + $0x10] sm:$0xff]
  %v15 = vld [vmem:[%s1 + $0x18] sm:$0xff]
  %v16 = vld [vmem:[%s1 + $0x20] sm:$0xff]
  %v17 = vld [vmem:[%s1 + $0x28] sm:$0xff]
  %v18 = vld [vmem:[%s1 + $0x30] sm:$0xff]
  %v19 = vld [vmem:[%s1 + $0x38] sm:$0xff]
  %v20 = vld [vmem:[%s1 + $0x40] sm:$0xff]
  %v21 = vld [vmem:[%s1 + $0x48] sm:$0xff]
  %v22 = vld [vmem:[%s1 + $0x50] sm:$0xff]
  %v23 = vld [vmem:[%s1 + $0x58] sm:$0xff]
  %v24 = vld [vmem:[%s1 + $0x60] sm:$0xff]
  %v25 = vld [vmem:[%s1 + $0x68] sm:$0xff]
  %v26 = vld [vmem:[%s1 + $0x70] sm:$0xff]
  %v27 = vld [vmem:[%s1 + $0x78] sm:$0xff]
  %28 = vmatprep.subr.mxu0 0.0
  %29 = vmatpush1.msra.mxu0 %v12
  %30 = vmatprep.subr.mxu0 0.0
  %31 = vmatpush1.msra.mxu0 %v13
  %32 = vmatprep.subr.mxu0 0.0
  %33 = vmatpush1.msra.mxu0 %v14
  %34 = vmatprep.subr.mxu0 0.0
  %35 = vmatpush1.msra.mxu0 %v15
  %36 = vmatprep.subr.mxu0 0.0
  %37 = vmatpush1.msra.mxu0 %v16
  %38 = vmatprep.subr.mxu0 0.0
  %39 = vmatpush1.msra.mxu0 %v17
  %40 = vmatprep.subr.mxu0 0.0
  %41 = vmatpush1.msra.mxu0 %v18
  %42 = vmatprep.subr.mxu0 0.0
  %43 = vmatpush1.msra.mxu0 %v19
  %44 = vmatprep.subr.mxu0 0.0
  %45 = vmatpush1.msra.mxu0 %v20
  %46 = vmatprep.subr.mxu0 0.0
  %47 = vmatpush1.msra.mxu0 %v21
  %48 = vmatprep.subr.mxu0 0.0
  %49 = vmatpush1.msra.mxu0 %v22
  %50 = vmatprep.subr.mxu0 0.0
  %51 = vmatpush1.msra.mxu0 %v23
  %52 = vmatprep.subr.mxu0 0.0
  %53 = vmatpush1.msra.mxu0 %v24
  %54 = vmatprep.subr.mxu0 0.0
  %55 = vmatpush1.msra.mxu0 %v25
  %56 = vmatprep.subr.mxu0 0.0
  %57 = vmatpush1.msra.mxu0 %v26
  %58 = vmatprep.subr.mxu0 0.0
  %59 = vmatpush1.msra.mxu0 %v27
  %60 = vmatprep.subr.mxu0 0.0
  %61 = vmatpush1.msra.mxu0 0.0
  %62 = vmatprep.subr.mxu0 0.0
  %63 = vmatpush1.msra.mxu0 0.0
  %64 = vmatprep.subr.mxu0 0.0
  %65 = vmatpush1.msra.mxu0 0.0
  %66 = vmatprep.subr.mxu0 0.0
  %67 = vmatpush1.msra.mxu0 0.0
  %68 = vmatprep.subr.mxu0 0.0
  %69 = vmatpush1.msra.mxu0 0.0
  %70 = vmatprep.subr.mxu0 0.0
  %71 = vmatpush1.msra.mxu0 0.0
  %72 = vmatprep.subr.mxu0 0.0
  %73 = vmatpush1.msra.mxu0 0.0
  %74 = vmatprep.subr.mxu0 0.0
  %75 = vmatpush1.msra.mxu0 0.0
  %76 = vmatprep.subr.mxu0 0.0
  %77 = vmatpush1.msra.mxu0 0.0
  %78 = vmatprep.subr.mxu0 0.0
  %79 = vmatpush1.msra.mxu0 0.0
  %80 = vmatprep.subr.mxu0 0.0
  %81 = vmatpush1.msra.mxu0 0.0
  %82 = vmatprep.subr.mxu0 0.0
  %83 = vmatpush1.msra.mxu0 0.0
  %84 = vmatprep.subr.mxu0 0.0
  %85 = vmatpush1.msra.mxu0 0.0
  %86 = vmatprep.subr.mxu0 0.0
  %87 = vmatpush1.msra.mxu0 0.0
  %88 = vmatprep.subr.mxu0 0.0
  %89 = vmatpush1.msra.mxu0 0.0
  %90 = vmatprep.subr.mxu0 0.0
  %91 = vmatpush1.msra.mxu0 0.0
  %92 = vmatprep.mubr.f32.mxu0 0.0
  %93 = vmatmul.mubr.f32.gmra.mrb[0].mxu0 %v11
  %v94 = vpop.f32.mrb[0].mxu0
  %v95 = vadd.f32 0.0, %v94
  %v96 = vpop.f32.mrb[0].mxu0
  %97 = vdwg.mxu0
  %98 = vst [vmem:[%s2] sm:$0xff] %v95
  // Predicated region
  $region10: #{text_encoder_forward.3} parent=0 // pred_check
    _
  $region11: #{text_encoder_forward.3} parent=0 // pred_check_branch
    %100 = sbr.rel (0) target = $region13
  $region12: #{text_encoder_forward.3} parent=0 // pred_region
    _
  $region13: #{text_encoder_forward.3} parent=0 // pred_fallthru
    _
  // Predicated region
  $region14: #{text_encoder_forward.3} parent=0 // pred_check
    _
  $region15: #{text_encoder_forward.3} parent=0 // pred_check_branch
    %102 = sbr.rel (0) target = $region17
  $region16: #{text_encoder_forward.3} parent=0 // pred_region
    _
  $region17: #{text_encoder_forward.3} parent=0 // pred_fallthru
    _

// kernel: text_encoder_forward.2
$region0: #{text_encoder_forward.2}
  #allocation0 [shape = 'u32[]', space=smem, size = 0x4, offset = 0x4, fixed_abs, tag = 'smem constant byte address 0x4 - core index']
  #allocation1 [shape = 'u32[144,128]{1,0:T(1,128)}', space=vmem, size = 0x12000, scoped, tag = 'internal scratch']
  #allocation2 [shape = 'f32[16,128]{1,0:T(8,128)}', space=vmem, size = 0x2000, scoped, tag = 'scratch operand']
  %s0 = inlined_call_operand.vmem [shape: f32[16,128], index: 0, kind: input, shape index: {}, may-alias: {0,5}]
  %s1 = inlined_call_operand.vmem [shape: f32[3,128,128], index: 1, kind: input, shape index: {}]
  %s2 = inlined_call_operand.vmem [shape: f32[3,1,128], index: 2, kind: input, shape index: {}]
  %s3 = inlined_call_operand.vmem [shape: f32[1,128], index: 3, kind: input, shape index: {}]
  %s4 = inlined_call_operand.vmem [shape: f32[1,128], index: 4, kind: input, shape index: {}]
  %s5 = inlined_call_operand.vmem [shape: f32[16,128], index: 5, kind: output, shape index: {}, may-alias: {0,5}]
  %s6 = sld [smem:[#allocation0]]
  $region30: #{text_encoder_forward.2} parent=0
    _
  %s8 = ssub.s32 1, %s6
  %s9 = scalar_select 0, %s8, %s6
  // Predicated region
  $region2: #{text_encoder_forward.2} parent=0 // pred_check
    _
  $region3: #{text_encoder_forward.2} parent=0 // pred_check_branch
    %11 = sbr.rel (0) target = $region5
  $region4: #{text_encoder_forward.2} parent=0 // pred_region
    _
  $region5: #{text_encoder_forward.2} parent=0 // pred_fallthru
    _
  // Predicated region
  $region6: #{text_encoder_forward.2} parent=0 // pred_check
    _
  $region7: #{text_encoder_forward.2} parent=0 // pred_check_branch
    %13 = sbr.rel (0) target = $region9
  $region8: #{text_encoder_forward.2} parent=0 // pred_region
    _
  $region9: #{text_encoder_forward.2} parent=0 // pred_fallthru
    _
  // Predicated region
  $region10: #{text_encoder_forward.2} parent=0 // pred_check
    _
  $region11: #{text_encoder_forward.2} parent=0 // pred_check_branch
    %15 = sbr.rel (0) target = $region13
  $region12: #{text_encoder_forward.2} parent=0 // pred_region
    _
  $region13: #{text_encoder_forward.2} parent=0 // pred_fallthru
    _
  // Predicated region
  $region14: #{text_encoder_forward.2} parent=0 // pred_check
    _
  $region15: #{text_encoder_forward.2} parent=0 // pred_check_branch
    %17 = sbr.rel (0) target = $region17
  $region16: #{text_encoder_forward.2} parent=0 // pred_region
    _
  $region17: #{text_encoder_forward.2} parent=0 // pred_fallthru
    _
  // Predicated region
  $region18: #{text_encoder_forward.2} parent=0 // pred_check
    _
  $region19: #{text_encoder_forward.2} parent=0 // pred_check_branch
    %19 = sbr.rel (0) target = $region21
  $region20: #{text_encoder_forward.2} parent=0 // pred_region
    _
  $region21: #{text_encoder_forward.2} parent=0 // pred_fallthru
    _
  %v20 = vld [vmem:[%s0] sm:$0xff]
  %v21 = vld [vmem:[%s0 + $0x8] sm:$0xff]
  %22 = vst [vmem:[#allocation2] sm:$0xff] %v20
  %23 = vst [vmem:[#allocation2 + $0x8] sm:$0xff] %v21
  %v24 = vld [vmem:[#allocation2] sm:$0xff]
  %v25 = vld [vmem:[#allocation2 + $0x8] sm:$0xff]
  %v26 = vld [vmem:[%s1] sm:$0xff]
  %v27 = vld [vmem:[%s1 + $0x8] sm:$0xff]
  %v28 = vld [vmem:[%s1 + $0x10] sm:$0xff]
  %v29 = vld [vmem:[%s1 + $0x18] sm:$0xff]
  %v30 = vld [vmem:[%s1 + $0x20] sm:$0xff]
  %v31 = vld [vmem:[%s1 + $0x28] sm:$0xff]
  %v32 = vld [vmem:[%s1 + $0x30] sm:$0xff]
  %v33 = vld [vmem:[%s1 + $0x38] sm:$0xff]
  %v34 = vld [vmem:[%s1 + $0x40] sm:$0xff]
  %v35 = vld [vmem:[%s1 + $0x48] sm:$0xff]
  %v36 = vld [vmem:[%s1 + $0x50] sm:$0xff]
  %v37 = vld [vmem:[%s1 + $0x58] sm:$0xff]
  %v38 = vld [vmem:[%s1 + $0x60] sm:$0xff]
  %v39 = vld [vmem:[%s1 + $0x68] sm:$0xff]
  %v40 = vld [vmem:[%s1 + $0x70] sm:$0xff]
  %v41 = vld [vmem:[%s1 + $0x78] sm:$0xff]
  %42 = vmatprep.subr.mxu0 0.0
  %43 = vmatpush1.msra.mxu0 %v26
  %44 = vmatprep.subr.mxu0 0.0
  %45 = vmatpush1.msra.mxu0 %v27
  %46 = vmatprep.subr.mxu0 0.0
  %47 = vmatpush1.msra.mxu0 %v28
  %48 = vmatprep.subr.mxu0 0.0
  %49 = vmatpush1.msra.mxu0 %v29
  %50 = vmatprep.subr.mxu0 0.0
  %51 = vmatpush1.msra.mxu0 %v30
  %52 = vmatprep.subr.mxu0 0.0
  %53 = vmatpush1.msra.mxu0 %v31
  %54 = vmatprep.subr.mxu0 0.0
  %55 = vmatpush1.msra.mxu0 %v32
  %56 = vmatprep.subr.mxu0 0.0
  %57 = vmatpush1.msra.mxu0 %v33
  %58 = vmatprep.subr.mxu0 0.0
  %59 = vmatpush1.msra.mxu0 %v34
  %60 = vmatprep.subr.mxu0 0.0
  %61 = vmatpush1.msra.mxu0 %v35
  %62 = vmatprep.subr.mxu0 0.0
  %63 = vmatpush1.msra.mxu0 %v36
  %64 = vmatprep.subr.mxu0 0.0
  %65 = vmatpush1.msra.mxu0 %v37
  %66 = vmatprep.subr.mxu0 0.0
  %67 = vmatpush1.msra.mxu0 %v38
  %68 = vmatprep.subr.mxu0 0.0
  %69 = vmatpush1.msra.mxu0 %v39
  %70 = vmatprep.subr.mxu0 0.0
  %71 = vmatpush1.msra.mxu0 %v40
  %72 = vmatprep.subr.mxu0 0.0
  %73 = vmatpush1.msra.mxu0 %v41
  %74 = vmatprep.subr.mxu0 0.0
  %75 = vmatpush1.msra.mxu0 0.0
  %76 = vmatprep.subr.mxu0 0.0
  %77 = vmatpush1.msra.mxu0 0.0
  %78 = vmatprep.subr.mxu0 0.0
  %79 = vmatpush1.msra.mxu0 0.0
  %80 = vmatprep.subr.mxu0 0.0
  %81 = vmatpush1.msra.mxu0 0.0
  %82 = vmatprep.subr.mxu0 0.0
  %83 = vmatpush1.msra.mxu0 0.0
  %84 = vmatprep.subr.mxu0 0.0
  %85 = vmatpush1.msra.mxu0 0.0
  %86 = vmatprep.subr.mxu0 0.0
  %87 = vmatpush1.msra.mxu0 0.0
  %88 = vmatprep.subr.mxu0 0.0
  %89 = vmatpush1.msra.mxu0 0.0
  %90 = vmatprep.subr.mxu0 0.0
  %91 = vmatpush1.msra.mxu0 0.0
  %92 = vmatprep.subr.mxu0 0.0
  %93 = vmatpush1.msra.mxu0 0.0
  %94 = vmatprep.subr.mxu0 0.0
  %95 = vmatpush1.msra.mxu0 0.0
  %96 = vmatprep.subr.mxu0 0.0
  %97 = vmatpush1.msra.mxu0 0.0
  %98 = vmatprep.subr.mxu0 0.0
  %99 = vmatpush1.msra.mxu0 0.0
  %100 = vmatprep.subr.mxu0 0.0
  %101 = vmatpush1.msra.mxu0 0.0
  %102 = vmatprep.subr.mxu0 0.0
  %103 = vmatpush1.msra.mxu0 0.0
  %104 = vmatprep.subr.mxu0 0.0
  %105 = vmatpush1.msra.mxu0 0.0
  %106 = vmatprep.mubr.f32.mxu0 0.0
  %107 = vmatmul.mubr.f32.gmra.mrb[0].mxu0 %v24
  %v108 = vpop.f32.mrb[0].mxu0
  %v109 = vadd.f32 0.0, %v108
  %v110 = vpop.f32.mrb[0].mxu0
  %111 = vmatprep.mubr.f32.mxu0 0.0
  %112 = vmatmul.mubr.f32.gmra.mrb[0].mxu0 %v25
  %v113 = vpop.f32.mrb[0].mxu0
  %v114 = vadd.f32 0.0, %v113
  %v115 = vpop.f32.mrb[0].mxu0
  %116 = vdwg.mxu0
  %v117 = vadd.f32 %v24, %v109
  %v118 = vadd.f32 %v25, %v114
  %v119 = vld [vmem:[%s2] sm:$0x1]
  %v121 = vlaneseq
  %v122 = vshrl.u32 %v121, 7
  %v123 = vsub.s32 0, %v122
  %v124 = vrot.slane %v119, %v123
  %v126 = vadd.f32 %v117, %v124
  %v127 = vadd.f32 %v118, %v124
  %128 = vst [vmem:[#allocation2] sm:$0xff] %v126
  %129 = vst [vmem:[#allocation2 + $0x8] sm:$0xff] %v127
  %v130 = vld [vmem:[#allocation2] sm:$0xff]
  %v131 = vld [vmem:[#allocation2 + $0x8] sm:$0xff]
  %s132 = scalar_lea.vmem %s1, 128
  %v133 = vld [vmem:[%s132] sm:$0xff]
  %v134 = vld [vmem:[%s132 + $0x8] sm:$0xff]
  %v135 = vld [vmem:[%s132 + $0x10] sm:$0xff]
  %v136 = vld [vmem:[%s132 + $0x18] sm:$0xff]
  %v137 = vld [vmem:[%s132 + $0x20] sm:$0xff]
  %v138 = vld [vmem:[%s132 + $0x28] sm:$0xff]
  %v139 = vld [vmem:[%s132 + $0x30] sm:$0xff]
  %v140 = vld [vmem:[%s132 + $0x38] sm:$0xff]
  %v141 = vld [vmem:[%s132 + $0x40] sm:$0xff]
  %v142 = vld [vmem:[%s132 + $0x48] sm:$0xff]
  %v143 = vld [vmem:[%s132 + $0x50] sm:$0xff]
  %v144 = vld [vmem:[%s132 + $0x58] sm:$0xff]
  %v145 = vld [vmem:[%s132 + $0x60] sm:$0xff]
  %v146 = vld [vmem:[%s132 + $0x68] sm:$0xff]
  %v147 = vld [vmem:[%s132 + $0x70] sm:$0xff]
  %v148 = vld [vmem:[%s132 + $0x78] sm:$0xff]
  %149 = vmatprep.subr.mxu0 0.0
  %150 = vmatpush1.msra.mxu0 %v133
  %151 = vmatprep.subr.mxu0 0.0
  %152 = vmatpush1.msra.mxu0 %v134
  %153 = vmatprep.subr.mxu0 0.0
  %154 = vmatpush1.msra.mxu0 %v135
  %155 = vmatprep.subr.mxu0 0.0
  %156 = vmatpush1.msra.mxu0 %v136
  %157 = vmatprep.subr.mxu0 0.0
  %158 = vmatpush1.msra.mxu0 %v137
  %159 = vmatprep.subr.mxu0 0.0
  %160 = vmatpush1.msra.mxu0 %v138
  %161 = vmatprep.subr.mxu0 0.0
  %162 = vmatpush1.msra.mxu0 %v139
  %163 = vmatprep.subr.mxu0 0.0
  %164 = vmatpush1.msra.mxu0 %v140
  %165 = vmatprep.subr.mxu0 0.0
  %166 = vmatpush1.msra.mxu0 %v141
  %167 = vmatprep.subr.mxu0 0.0
  %168 = vmatpush1.msra.mxu0 %v142
  %169 = vmatprep.subr.mxu0 0.0
  %170 = vmatpush1.msra.mxu0 %v143
  %171 = vmatprep.subr.mxu0 0.0
  %172 = vmatpush1.msra.mxu0 %v144
  %173 = vmatprep.subr.mxu0 0.0
  %174 = vmatpush1.msra.mxu0 %v145
  %175 = vmatprep.subr.mxu0 0.0
  %176 = vmatpush1.msra.mxu0 %v146
  %177 = vmatprep.subr.mxu0 0.0
  %178 = vmatpush1.msra.mxu0 %v147
  %179 = vmatprep.subr.mxu0 0.0
  %180 = vmatpush1.msra.mxu0 %v148
  %181 = vmatprep.subr.mxu0 0.0
  %182 = vmatpush1.msra.mxu0 0.0
  %183 = vmatprep.subr.mxu0 0.0
  %184 = vmatpush1.msra.mxu0 0.0
  %185 = vmatprep.subr.mxu0 0.0
  %186 = vmatpush1.msra.mxu0 0.0
  %187 = vmatprep.subr.mxu0 0.0
  %188 = vmatpush1.msra.mxu0 0.0
  %189 = vmatprep.subr.mxu0 0.0
  %190 = vmatpush1.msra.mxu0 0.0
  %191 = vmatprep.subr.mxu0 0.0
  %192 = vmatpush1.msra.mxu0 0.0
  %193 = vmatprep.subr.mxu0 0.0
  %194 = vmatpush1.msra.mxu0 0.0
  %195 = vmatprep.subr.mxu0 0.0
  %196 = vmatpush1.msra.mxu0 0.0
  %197 = vmatprep.subr.mxu0 0.0
  %198 = vmatpush1.msra.mxu0 0.0
  %199 = vmatprep.subr.mxu0 0.0
  %200 = vmatpush1.msra.mxu0 0.0
  %201 = vmatprep.subr.mxu0 0.0
  %202 = vmatpush1.msra.mxu0 0.0
  %203 = vmatprep.subr.mxu0 0.0
  %204 = vmatpush1.msra.mxu0 0.0
  %205 = vmatprep.subr.mxu0 0.0
  %206 = vmatpush1.msra.mxu0 0.0
  %207 = vmatprep.subr.mxu0 0.0
  %208 = vmatpush1.msra.mxu0 0.0
  %209 = vmatprep.subr.mxu0 0.0
  %210 = vmatpush1.msra.mxu0 0.0
  %211 = vmatprep.subr.mxu0 0.0
  %212 = vmatpush1.msra.mxu0 0.0
  %213 = vmatprep.mubr.f32.mxu0 0.0
  %214 = vmatmul.mubr.f32.gmra.mrb[0].mxu0 %v130
  %v215 = vpop.f32.mrb[0].mxu0
  %v216 = vadd.f32 0.0, %v215
  %v217 = vpop.f32.mrb[0].mxu0
  %218 = vmatprep.mubr.f32.mxu0 0.0
  %219 = vmatmul.mubr.f32.gmra.mrb[0].mxu0 %v131
  %v220 = vpop.f32.mrb[0].mxu0
  %v221 = vadd.f32 0.0, %v220
  %v222 = vpop.f32.mrb[0].mxu0
  %223 = vdwg.mxu0
  %v224 = vadd.f32 %v130, %v216
  %v225 = vadd.f32 %v131, %v221
  %s226 = scalar_lea.vmem %s2, 1
  %v227 = vld [vmem:[%s226] sm:$0x1]
  %v229 = vlaneseq
  %v230 = vshrl.u32 %v229, 7
  %v231 = vsub.s32 0, %v230
  %v232 = vrot.slane %v227, %v231
  %v234 = vadd.f32 %v224, %v232
  %v235 = vadd.f32 %v225, %v232
  %236 = vst [vmem:[#allocation2] sm:$0xff] %v234
  %237 = vst [vmem:[#allocation2 + $0x8] sm:$0xff] %v235
  %v238 = vld [vmem:[#allocation2] sm:$0xff]
  %v239 = vld [vmem:[#allocation2 + $0x8] sm:$0xff]
  %s240 = scalar_lea.vmem %s1, 256
  %v241 = vld [vmem:[%s240] sm:$0xff]
  %v242 = vld [vmem:[%s240 + $0x8] sm:$0xff]
  %v243 = vld [vmem:[%s240 + $0x10] sm:$0xff]
  %v244 = vld [vmem:[%s240 + $0x18] sm:$0xff]
  %v245 = vld [vmem:[%s240 + $0x20] sm:$0xff]
  %v246 = vld [vmem:[%s240 + $0x28] sm:$0xff]
  %v247 = vld [vmem:[%s240 + $0x30] sm:$0xff]
  %v248 = vld [vmem:[%s240 + $0x38] sm:$0xff]
  %v249 = vld [vmem:[%s240 + $0x40] sm:$0xff]
  %v250 = vld [vmem:[%s240 + $0x48] sm:$0xff]
  %v251 = vld [vmem:[%s240 + $0x50] sm:$0xff]
  %v252 = vld [vmem:[%s240 + $0x58] sm:$0xff]
  %v253 = vld [vmem:[%s240 + $0x60] sm:$0xff]
  %v254 = vld [vmem:[%s240 + $0x68] sm:$0xff]
  %v255 = vld [vmem:[%s240 + $0x70] sm:$0xff]
  %v256 = vld [vmem:[%s240 + $0x78] sm:$0xff]
  %257 = vmatprep.subr.mxu0 0.0
  %258 = vmatpush1.msra.mxu0 %v241
  %259 = vmatprep.subr.mxu0 0.0
  %260 = vmatpush1.msra.mxu0 %v242
  %261 = vmatprep.subr.mxu0 0.0
  %262 = vmatpush1.msra.mxu0 %v243
  %263 = vmatprep.subr.mxu0 0.0
  %264 = vmatpush1.msra.mxu0 %v244
  %265 = vmatprep.subr.mxu0 0.0
  %266 = vmatpush1.msra.mxu0 %v245
  %267 = vmatprep.subr.mxu0 0.0
  %268 = vmatpush1.msra.mxu0 %v246
  %269 = vmatprep.subr.mxu0 0.0
  %270 = vmatpush1.msra.mxu0 %v247
  %271 = vmatprep.subr.mxu0 0.0
  %272 = vmatpush1.msra.mxu0 %v248
  %273 = vmatprep.subr.mxu0 0.0
  %274 = vmatpush1.msra.mxu0 %v249
  %275 = vmatprep.subr.mxu0 0.0
  %276 = vmatpush1.msra.mxu0 %v250
  %277 = vmatprep.subr.mxu0 0.0
  %278 = vmatpush1.msra.mxu0 %v251
  %279 = vmatprep.subr.mxu0 0.0
  %280 = vmatpush1.msra.mxu0 %v252
  %281 = vmatprep.subr.mxu0 0.0
  %282 = vmatpush1.msra.mxu0 %v253
  %283 = vmatprep.subr.mxu0 0.0
  %284 = vmatpush1.msra.mxu0 %v254
  %285 = vmatprep.subr.mxu0 0.0
  %286 = vmatpush1.msra.mxu0 %v255
  %287 = vmatprep.subr.mxu0 0.0
  %288 = vmatpush1.msra.mxu0 %v256
  %289 = vmatprep.subr.mxu0 0.0
  %290 = vmatpush1.msra.mxu0 0.0
  %291 = vmatprep.subr.mxu0 0.0
  %292 = vmatpush1.msra.mxu0 0.0
  %293 = vmatprep.subr.mxu0 0.0
  %294 = vmatpush1.msra.mxu0 0.0
  %295 = vmatprep.subr.mxu0 0.0
  %296 = vmatpush1.msra.mxu0 0.0
  %297 = vmatprep.subr.mxu0 0.0
  %298 = vmatpush1.msra.mxu0 0.0
  %299 = vmatprep.subr.mxu0 0.0
  %300 = vmatpush1.msra.mxu0 0.0
  %301 = vmatprep.subr.mxu0 0.0
  %302 = vmatpush1.msra.mxu0 0.0
  %303 = vmatprep.subr.mxu0 0.0
  %304 = vmatpush1.msra.mxu0 0.0
  %305 = vmatprep.subr.mxu0 0.0
  %306 = vmatpush1.msra.mxu0 0.0
  %307 = vmatprep.subr.mxu0 0.0
  %308 = vmatpush1.msra.mxu0 0.0
  %309 = vmatprep.subr.mxu0 0.0
  %310 = vmatpush1.msra.mxu0 0.0
  %311 = vmatprep.subr.mxu0 0.0
  %312 = vmatpush1.msra.mxu0 0.0
  %313 = vmatprep.subr.mxu0 0.0
  %314 = vmatpush1.msra.mxu0 0.0
  %315 = vmatprep.subr.mxu0 0.0
  %316 = vmatpush1.msra.mxu0 0.0
  %317 = vmatprep.subr.mxu0 0.0
  %318 = vmatpush1.msra.mxu0 0.0
  %319 = vmatprep.subr.mxu0 0.0
  %320 = vmatpush1.msra.mxu0 0.0
  %321 = vmatprep.mubr.f32.mxu0 0.0
  %322 = vmatmul.mubr.f32.gmra.mrb[0].mxu0 %v238
  %v323 = vpop.f32.mrb[0].mxu0
  %v324 = vadd.f32 0.0, %v323
  %v325 = vpop.f32.mrb[0].mxu0
  %326 = vmatprep.mubr.f32.mxu0 0.0
  %327 = vmatmul.mubr.f32.gmra.mrb[0].mxu0 %v239
  %v328 = vpop.f32.mrb[0].mxu0
  %v329 = vadd.f32 0.0, %v328
  %v330 = vpop.f32.mrb[0].mxu0
  %331 = vdwg.mxu0
  %v332 = vadd.f32 %v238, %v324
  %v333 = vadd.f32 %v239, %v329
  %s334 = scalar_lea.vmem %s2, 2
  %v335 = vld [vmem:[%s334] sm:$0x1]
  %v337 = vlaneseq
  %v338 = vshrl.u32 %v337, 7
  %v339 = vsub.s32 0, %v338
  %v340 = vrot.slane %v335, %v339
  %v342 = vadd.f32 %v332, %v340
  %v343 = vadd.f32 %v333, %v340
  %344 = vst [vmem:[#allocation2] sm:$0xff] %v342
  %345 = vst [vmem:[#allocation2 + $0x8] sm:$0xff] %v343
  %v346 = vld [vmem:[#allocation2] sm:$0xff]
  %v347 = vld [vmem:[#allocation2 + $0x8] sm:$0xff]
  %v348 = vlaneseq
  %v349 = vand.u32 %v348, 127
  %vm350 = vcmp.lt.s32.totalorder %v349, 32
  %v351 = vsel %vm350, 1, 0
  %v352 = vcvt.s32.f32 %v351
  %v353 = vmul.f32 %v346, %v352
  %v354 = vmul.f32 %v347, %v352
  %355 = vadd.xlane.f32.xlu0 %v353
  %v356 = vpop.xlane.xlu0 %355
  %357 = vadd.xlane.f32.xlu0 %v354
  %v358 = vpop.xlane.xlu0 %357
  %v359 = vmul.f32 %v356, 0.03125
  %v360 = vmul.f32 %v358, 0.03125
  %v361 = vsub.f32 %v346, %v359
  %v362 = vsub.f32 %v347, %v360
  %v363 = vmul.f32 %v361, %v352
  %v364 = vmul.f32 %v362, %v352
  %v365 = vmul.f32 %v363, %v363
  %v366 = vmul.f32 %v364, %v364
  %367 = vadd.xlane.f32.xlu0 %v365
  %v368 = vpop.xlane.xlu0 %367
  %369 = vadd.xlane.f32.xlu0 %v366
  %v370 = vpop.xlane.xlu0 %369
  %v371 = vmul.f32 %v368, 0.032258064
  %v372 = vmul.f32 %v370, 0.032258064
  %v373 = vrsqrt.pop %v371
  %v374 = vmul.f32 %v371, %v373
  %vm375 = vcmp.eq.f32.partialorder %v371, inf
  %v376 = vsel %vm375, %v371, %v374
  %vm377 = vcmp.eq.f32.partialorder %v371, 0.0
  %v378 = vand.u32 %v371, 2147483648
  %v379 = vsel %vm377, %v378, %v376
  %v380 = vrsqrt.pop %v372
  %v381 = vmul.f32 %v372, %v380
  %vm382 = vcmp.eq.f32.partialorder %v372, inf
  %v383 = vsel %vm382, %v372, %v381
  %vm384 = vcmp.eq.f32.partialorder %v372, 0.0
  %v385 = vand.u32 %v372, 2147483648
  %v386 = vsel %vm384, %v385, %v383
  %v387 = vadd.f32 %v379, 1e-06
  %v388 = vadd.f32 %v386, 1e-06
  %v389 = vrcp.pop %v387
  %v390 = vrcp.pop %v388
  %v391 = vld [vmem:[%s3] sm:$0x1]
  %v392 = vmul.f32 %v363, %v389
  %v393 = vmul.f32 %v364, %v390
  %v395 = vlaneseq
  %v396 = vshrl.u32 %v395, 7
  %v397 = vsub.s32 0, %v396
  %v398 = vrot.slane %v391, %v397
  %v400 = vmul.f32 %v398, %v392
  %v401 = vmul.f32 %v398, %v393
  %v402 = vld [vmem:[%s4] sm:$0x1]
  %v404 = vlaneseq
  %v405 = vshrl.u32 %v404, 7
  %v406 = vsub.s32 0, %v405
  %v407 = vrot.slane %v402, %v406
  %v409 = vadd.f32 %v400, %v407
  %v410 = vadd.f32 %v401, %v407
  %411 = vst [vmem:[%s5] sm:$0xff] %v409
  %412 = vst [vmem:[%s5 + $0x8] sm:$0xff] %v410
  // Predicated region
  $region22: #{text_encoder_forward.2} parent=0 // pred_check
    _
  $region23: #{text_encoder_forward.2} parent=0 // pred_check_branch
    %414 = sbr.rel (0) target = $region25
  $region24: #{text_encoder_forward.2} parent=0 // pred_region
    _
  $region25: #{text_encoder_forward.2} parent=0 // pred_fallthru
    _
  // Predicated region
  $region26: #{text_encoder_forward.2} parent=0 // pred_check
    _
  $region27: #{text_encoder_forward.2} parent=0 // pred_check_branch
    %416 = sbr.rel (0) target = $region29
  $region28: #{text_encoder_forward.2} parent=0 // pred_region
    _
  $region29: #{text_encoder_forward.2} parent=0 // pred_fallthru
    _

</llo_original>
